<compile_context>
chip_gen: v7x
topology: tpu7x:2x2x1
jax: 0.10.0
libtpu: 0.0.40
codegen_flags: <defaults>
</compile_context>

<pallas_src>
import jax
import jax.numpy as jnp
from jax.experimental import pallas as pl
from jax.experimental.pallas import tpu as pltpu


def _choose_tiling(B, C, HW, itemsize, device_kind):
    kind = (device_kind or "").lower()
    if "v7" in kind:
        budget, want_two = 20 << 20, True      # 2 TCs -> keep >=2 grid programs
    elif "v6" in kind:
        budget, want_two = 24 << 20, False     # single TC, big blocks
    else:                                      # v5e / unknown: conservative
        budget, want_two = 12 << 20, False
    per_buf = budget // 2                      # input blocks are double-buffered
    elem_bytes = C * HW * itemsize

    # Preferred: full-spatial blocks holding as many batch elements as fit.
    bt = None
    for d in range(1, B + 1):
        if B % d:
            continue
        if d * elem_bytes > per_buf:
            continue
        if want_two and B >= 2 and B // d < 2:
            continue
        bt = d
    if bt is None:                             # relax the >=2-programs rule
        for d in range(1, B + 1):
            if B % d == 0 and d * elem_bytes <= per_buf:
                bt = d
    if bt is not None:
        return bt, HW

    # A single batch element exceeds the budget: split the spatial axis
    # (lane-aligned divisors only, to keep the BlockSpec tiling legal).
    cands = [d for d in range(128, HW + 1, 128) if HW % d == 0]
    fit = [d for d in cands if C * d * itemsize <= per_buf]
    hw_blk = max(fit) if fit else (min(cands) if cands else HW)
    return 1, hw_blk


def _choose_subchunk(Bt, C, hw_blk, max_f32_elems=32 * 1024):
    """Largest lane-aligned sub-chunk of the spatial axis that stays <=~32 vregs."""
    if Bt * C * hw_blk <= max_f32_elems:
        return hw_blk
    cands = [d for d in range(128, hw_blk + 1, 128) if hw_blk % d == 0]
    fit = [d for d in cands if Bt * C * d <= max_f32_elems]
    if fit:
        return max(fit)
    return min(cands) if cands else hw_blk


def _make_focus_channel_kernel(Bt, C, Cr, HW, hw_blk, sub):
    n_sub = hw_blk // sub
    inv_hw = 1.0 / float(HW)

    def kernel(x_ref, w1_ref, w2t_ref, o_ref, sum_ref, max_ref):
        s = pl.program_id(1)

        @pl.when(s == 0)
        def _init():
            sum_ref[...] = jnp.zeros_like(sum_ref)
            max_ref[...] = jnp.full_like(max_ref, -jnp.inf)

        # Streaming pooling: never materialize the whole block as a live value.
        s_val = jnp.zeros((Bt, C), jnp.float32)
        m_val = jnp.full((Bt, C), -jnp.inf, jnp.float32)
        for i in range(n_sub):
            xc = x_ref[:, :, pl.ds(i * sub, sub)].astype(jnp.float32)
            s_val = s_val + jnp.sum(xc, axis=2)
            m_val = jnp.maximum(m_val, jnp.max(xc, axis=2))
        sum_ref[...] = sum_ref[...] + s_val
        max_ref[...] = jnp.maximum(max_ref[...], m_val)

        @pl.when(s == pl.num_programs(1) - 1)
        def _finalize():
            avg_c = sum_ref[...] * jnp.float32(inv_hw)           # (Bt, C)
            max_c = max_ref[...]                                 # (Bt, C)
            # Shared MLP; the expand layer is linear and bias-free, so
            # MLP(avg) + MLP(max) == (relu(avg@W1^T) + relu(max@W1^T)) @ W2^T.
            pooled = jnp.concatenate([avg_c, max_c], axis=0)     # (2*Bt, C)
            if Cr <= 16:
                # Tiny bottleneck: keep it entirely off the MXU.
                logits = jnp.zeros((Bt, C), jnp.float32)
                for r in range(Cr):
                    hr = jnp.sum(pooled * w1_ref[r:r + 1, :], axis=-1,
                                 keepdims=True)                  # (2*Bt, 1)
                    hr = jnp.maximum(hr, 0.0)
                    hr = hr[:Bt, :] + hr[Bt:, :]                 # (Bt, 1)
                    logits = logits + hr * w2t_ref[r:r + 1, :]   # (Bt, C)
            else:
                h = jax.lax.dot_general(pooled, w1_ref[...],
                                        (((1,), (1,)), ((), ())),
                                        preferred_element_type=jnp.float32)
                h = jnp.maximum(h, 0.0)
                h = h[:Bt, :] + h[Bt:, :]                        # (Bt, Cr)
                logits = jnp.dot(h, w2t_ref[...],
                                 preferred_element_type=jnp.float32)
            # sigmoid on the EUP: exp + approximate reciprocal.
            attn = pl.reciprocal(1.0 + jnp.exp(-logits), approx=True)
            o_ref[...] = attn[:, None, :].astype(o_ref.dtype)

    return kernel


def focus_channel(x, w1, w2):
    """FocusChannel.forward.

    x : (B, C, H, W)      input tensor
    w1: (C//comp, C)      `compress` 1x1-conv weight (no bias)
    w2: (C, C//comp)      `expand`   1x1-conv weight (no bias)
    returns (B, C, 1, 1) sigmoid channel-attention map.
    """
    B, C, H, W = x.shape
    Cr = w1.shape[0]
    HW = H * W

    try:
        device_kind = jax.devices()[0].device_kind
    except Exception:
        device_kind = ""
    Bt, hw_blk = _choose_tiling(B, C, HW, x.dtype.itemsize, device_kind)
    sub = _choose_subchunk(Bt, C, hw_blk)
    nb, ns = B // Bt, HW // hw_blk

    x2 = x.reshape(B, C, HW)                        # keep input dtype (no upcast)
    w1f = jnp.asarray(w1, jnp.float32)              # (Cr, C)
    w2t = jnp.asarray(w2, jnp.float32).T            # (Cr, C) == W2^T

    in_block_bytes = Bt * C * hw_blk * x.dtype.itemsize
    vmem_limit = int(min(max(2 * in_block_bytes + (4 << 20), 16 << 20), 48 << 20))

    kernel = _make_focus_channel_kernel(Bt, C, Cr, HW, hw_blk, sub)
    out = pl.pallas_call(
        kernel,
        out_shape=jax.ShapeDtypeStruct((B, 1, C), x.dtype),
        grid_spec=pltpu.PrefetchScalarGridSpec(
            num_scalar_prefetch=0,
            grid=(nb, ns),
            in_specs=[
                pl.BlockSpec((Bt, C, hw_blk), lambda b, s: (b, 0, s)),  # x block
                pl.BlockSpec((Cr, C), lambda b, s: (0, 0)),             # W1
                pl.BlockSpec((Cr, C), lambda b, s: (0, 0)),             # W2^T
            ],
            out_specs=pl.BlockSpec((Bt, 1, C), lambda b, s: (b, 0, 0)),
            scratch_shapes=[pltpu.VMEM((Bt, C), jnp.float32),   # running sum
                            pltpu.VMEM((Bt, C), jnp.float32)],  # running max
        ),
        compiler_params=pltpu.CompilerParams(
            dimension_semantics=("parallel", "arbitrary"),
            vmem_limit_bytes=vmem_limit),
    )(x2, w1f, w2t)
    return out[:, 0, :].reshape(B, C, 1, 1)


def reference(x, w1, w2):
    """Pure-JAX reference mirroring the PyTorch FocusChannel module."""
    hp = jax.lax.Precision.HIGHEST
    avg = jnp.mean(x, axis=(2, 3))                  # AdaptiveAvgPool2d(1)
    mx = jnp.max(x, axis=(2, 3))                    # AdaptiveMaxPool2d(1)

    def mlp(v):
        h = jax.nn.relu(jnp.matmul(v, w1.T, precision=hp))
        return jnp.matmul(h, w2.T, precision=hp)

    return jax.nn.sigmoid(mlp(avg) + mlp(mx))[:, :, None, None]


if __name__ == "__main__":
    B, C, H, W = 8, 32, 16, 16          # compression=16 -> Cr = 2
    Cr = C // 16

    key = jax.random.PRNGKey(0)
    k1, k2, k3 = jax.random.split(key, 3)
    x = jax.random.normal(k1, (B, C, H, W), dtype=jnp.float32)
    w1 = jax.random.normal(k2, (Cr, C), dtype=jnp.float32) * (1.0 / jnp.sqrt(C))
    w2 = jax.random.normal(k3, (C, Cr), dtype=jnp.float32) * (1.0 / jnp.sqrt(Cr))

    out = jax.block_until_ready(focus_channel(x, w1, w2))
    ref = jax.block_until_ready(reference(x, w1, w2))

    assert out.shape == (B, C, 1, 1)
    assert bool(jnp.allclose(out, ref, atol=3e-3, rtol=3e-3)), "mismatch vs reference"
    print("KERNEL_OK")
</pallas_src>

<mosaic_0001>
module attributes {stable_mosaic.version = 11 : i64} {
  func.func @kernel(%arg0: i32, %arg1: i32, %arg2: memref<8x32x256xf32, #tpu.memory_space<vmem>>, %arg3: memref<2x32xf32, #tpu.memory_space<vmem>>, %arg4: memref<2x32xf32, #tpu.memory_space<vmem>>, %arg5: memref<8x1x32xf32, #tpu.memory_space<vmem>>, %arg6: memref<8x32xf32, #tpu.memory_space<vmem>>, %arg7: memref<8x32xf32, #tpu.memory_space<vmem>>) attributes {dimension_semantics = [#tpu.dimension_semantics<parallel>, #tpu.dimension_semantics<arbitrary>], iteration_bounds = array<i64: 1, 1>, scalar_prefetch = 0 : i64, scratch_operands = 2 : i64, tpu.core_type = #tpu.core_type<tc>, window_params = [{transform_indices = @transform_0, window_bounds = array<i64: 8, 32, 256>}, {pipeline_mode = #tpu.pipeline_mode<synchronous>, transform_indices = @transform_1, window_bounds = array<i64: 2, 32>}, {pipeline_mode = #tpu.pipeline_mode<synchronous>, transform_indices = @transform_2, window_bounds = array<i64: 2, 32>}, {transform_indices = @transform_3, window_bounds = array<i64: 8, 1, 32>}]} {
    %c0_i32 = arith.constant 0 : i32
    %0 = arith.cmpi eq, %arg1, %c0_i32 : i32
    %1 = arith.extui %0 : i1 to i32
    %c0_i32_0 = arith.constant 0 : i32
    %2 = arith.cmpi ne, %1, %c0_i32_0 : i32
    scf.if %2 {
      %cst_20 = arith.constant 0.000000e+00 : f32
      %24 = vector.broadcast %cst_20 : f32 to vector<8x32xf32>
      %c0_21 = arith.constant 0 : index
      %c0_22 = arith.constant 0 : index
      %25 = vector.load %arg6[%c0_21, %c0_22] : memref<8x32xf32, #tpu.memory_space<vmem>>, vector<8x32xf32>
      tpu.vector_store %arg6[%c0_21, %c0_22], %24 {strides = array<i32>} : memref<8x32xf32, #tpu.memory_space<vmem>>, vector<8x32xf32>,
      %cst_23 = arith.constant 0xFF800000 : f32
      %26 = vector.broadcast %cst_23 : f32 to vector<8x32xf32>
      %c0_24 = arith.constant 0 : index
      %c0_25 = arith.constant 0 : index
      %27 = vector.load %arg7[%c0_24, %c0_25] : memref<8x32xf32, #tpu.memory_space<vmem>>, vector<8x32xf32>
      tpu.vector_store %arg7[%c0_24, %c0_25], %26 {strides = array<i32>} : memref<8x32xf32, #tpu.memory_space<vmem>>, vector<8x32xf32>,
    } else {
    }
    %cst = arith.constant 0.000000e+00 : f32
    %3 = vector.broadcast %cst : f32 to vector<8x32xf32>
    %cst_1 = arith.constant 0xFF800000 : f32
    %4 = vector.broadcast %cst_1 : f32 to vector<8x32xf32>
    %c0 = arith.constant 0 : index
    %c0_2 = arith.constant 0 : index
    %c0_3 = arith.constant 0 : index
    %5 = vector.load %arg2[%c0, %c0_2, %c0_3] : memref<8x32x256xf32, #tpu.memory_space<vmem>>, vector<8x32x128xf32>
    %cst_4 = arith.constant dense<0.000000e+00> : vector<8x32xf32>
    %6 = vector.multi_reduction <add>, %5, %cst_4 [2] : vector<8x32x128xf32> to vector<8x32xf32>
    %7 = arith.addf %3, %6 : vector<8x32xf32>
    %cst_5 = arith.constant dense<0xFF800000> : vector<8x32xf32>
    %8 = vector.multi_reduction <maximumf>, %5, %cst_5 [2] : vector<8x32x128xf32> to vector<8x32xf32>
    %9 = arith.maximumf %4, %8 : vector<8x32xf32>
    %c0_6 = arith.constant 0 : index
    %c0_7 = arith.constant 0 : index
    %c128 = arith.constant 128 : index
    %10 = vector.load %arg2[%c0_6, %c0_7, %c128] : memref<8x32x256xf32, #tpu.memory_space<vmem>>, vector<8x32x128xf32>
    %cst_8 = arith.constant dense<0.000000e+00> : vector<8x32xf32>
    %11 = vector.multi_reduction <add>, %10, %cst_8 [2] : vector<8x32x128xf32> to vector<8x32xf32>
    %12 = arith.addf %7, %11 : vector<8x32xf32>
    %cst_9 = arith.constant dense<0xFF800000> : vector<8x32xf32>
    %13 = vector.multi_reduction <maximumf>, %10, %cst_9 [2] : vector<8x32x128xf32> to vector<8x32xf32>
    %14 = arith.maximumf %9, %13 : vector<8x32xf32>
    %c0_10 = arith.constant 0 : index
    %c0_11 = arith.constant 0 : index
    %15 = vector.load %arg6[%c0_10, %c0_11] : memref<8x32xf32, #tpu.memory_space<vmem>>, vector<8x32xf32>
    %16 = arith.addf %15, %12 : vector<8x32xf32>
    %c0_12 = arith.constant 0 : index
    %c0_13 = arith.constant 0 : index
    %17 = vector.load %arg6[%c0_12, %c0_13] : memref<8x32xf32, #tpu.memory_space<vmem>>, vector<8x32xf32>
    tpu.vector_store %arg6[%c0_12, %c0_13], %16 {strides = array<i32>} : memref<8x32xf32, #tpu.memory_space<vmem>>, vector<8x32xf32>,
    %c0_14 = arith.constant 0 : index
    %c0_15 = arith.constant 0 : index
    %18 = vector.load %arg7[%c0_14, %c0_15] : memref<8x32xf32, #tpu.memory_space<vmem>>, vector<8x32xf32>
    %19 = arith.maximumf %18, %14 : vector<8x32xf32>
    %c0_16 = arith.constant 0 : index
    %c0_17 = arith.constant 0 : index
    %20 = vector.load %arg7[%c0_16, %c0_17] : memref<8x32xf32, #tpu.memory_space<vmem>>, vector<8x32xf32>
    tpu.vector_store %arg7[%c0_16, %c0_17], %19 {strides = array<i32>} : memref<8x32xf32, #tpu.memory_space<vmem>>, vector<8x32xf32>,
    %c0_i32_18 = arith.constant 0 : i32
    %21 = arith.cmpi eq, %arg1, %c0_i32_18 : i32
    %22 = arith.extui %21 : i1 to i32
    %c0_i32_19 = arith.constant 0 : i32
    %23 = arith.cmpi ne, %22, %c0_i32_19 : i32
    scf.if %23 {
      %c0_20 = arith.constant 0 : index
      %c0_21 = arith.constant 0 : index
      %24 = vector.load %arg6[%c0_20, %c0_21] : memref<8x32xf32, #tpu.memory_space<vmem>>, vector<8x32xf32>
      %cst_22 = arith.constant 3.906250e-03 : f32
      %25 = vector.broadcast %cst_22 : f32 to vector<8x32xf32>
      %26 = arith.mulf %24, %25 : vector<8x32xf32>
      %c0_23 = arith.constant 0 : index
      %c0_24 = arith.constant 0 : index
      %27 = vector.load %arg7[%c0_23, %c0_24] : memref<8x32xf32, #tpu.memory_space<vmem>>, vector<8x32xf32>
      %28 = tpu.concatenate %26, %27 in 0 : vector<8x32xf32>, vector<8x32xf32> -> vector<16x32xf32>
      %cst_25 = arith.constant 0.000000e+00 : f32
      %29 = vector.broadcast %cst_25 : f32 to vector<8x32xf32>
      %c0_26 = arith.constant 0 : index
      %c0_27 = arith.constant 0 : index
      %30 = vector.load %arg3[%c0_26, %c0_27] : memref<2x32xf32, #tpu.memory_space<vmem>>, vector<1x32xf32>
      %31 = vector.broadcast %30 : vector<1x32xf32> to vector<16x32xf32>
      %32 = arith.mulf %28, %31 : vector<16x32xf32>
      %cst_28 = arith.constant dense<0.000000e+00> : vector<16xf32>
      %33 = vector.multi_reduction <add>, %32, %cst_28 [1] : vector<16x32xf32> to vector<16xf32>
      %34 = vector.shape_cast %33 : vector<16xf32> to vector<16x1xf32>
      %cst_29 = arith.constant 0.000000e+00 : f32
      %35 = vector.broadcast %cst_29 : f32 to vector<16x1xf32>
      %36 = arith.maximumf %34, %35 : vector<16x1xf32>
      %37 = vector.extract_strided_slice %36 {offsets = [0, 0], sizes = [8, 1], strides = [1, 1]} : vector<16x1xf32> to vector<8x1xf32>
      %38 = vector.extract_strided_slice %36 {offsets = [8, 0], sizes = [8, 1], strides = [1, 1]} : vector<16x1xf32> to vector<8x1xf32>
      %39 = arith.addf %37, %38 : vector<8x1xf32>
      %c0_30 = arith.constant 0 : index
      %c0_31 = arith.constant 0 : index
      %40 = vector.load %arg4[%c0_30, %c0_31] : memref<2x32xf32, #tpu.memory_space<vmem>>, vector<1x32xf32>
      %41 = vector.broadcast %39 : vector<8x1xf32> to vector<8x32xf32>
      %42 = vector.broadcast %40 : vector<1x32xf32> to vector<8x32xf32>
      %43 = arith.mulf %41, %42 : vector<8x32xf32>
      %44 = arith.addf %29, %43 : vector<8x32xf32>
      %c1 = arith.constant 1 : index
      %c0_32 = arith.constant 0 : index
      %45 = vector.load %arg3[%c1, %c0_32] : memref<2x32xf32, #tpu.memory_space<vmem>>, vector<1x32xf32>
      %46 = vector.broadcast %45 : vector<1x32xf32> to vector<16x32xf32>
      %47 = arith.mulf %28, %46 : vector<16x32xf32>
      %cst_33 = arith.constant dense<0.000000e+00> : vector<16xf32>
      %48 = vector.multi_reduction <add>, %47, %cst_33 [1] : vector<16x32xf32> to vector<16xf32>
      %49 = vector.shape_cast %48 : vector<16xf32> to vector<16x1xf32>
      %cst_34 = arith.constant 0.000000e+00 : f32
      %50 = vector.broadcast %cst_34 : f32 to vector<16x1xf32>
      %51 = arith.maximumf %49, %50 : vector<16x1xf32>
      %52 = vector.extract_strided_slice %51 {offsets = [0, 0], sizes = [8, 1], strides = [1, 1]} : vector<16x1xf32> to vector<8x1xf32>
      %53 = vector.extract_strided_slice %51 {offsets = [8, 0], sizes = [8, 1], strides = [1, 1]} : vector<16x1xf32> to vector<8x1xf32>
      %54 = arith.addf %52, %53 : vector<8x1xf32>
      %c1_35 = arith.constant 1 : index
      %c0_36 = arith.constant 0 : index
      %55 = vector.load %arg4[%c1_35, %c0_36] : memref<2x32xf32, #tpu.memory_space<vmem>>, vector<1x32xf32>
      %56 = vector.broadcast %54 : vector<8x1xf32> to vector<8x32xf32>
      %57 = vector.broadcast %55 : vector<1x32xf32> to vector<8x32xf32>
      %58 = arith.mulf %56, %57 : vector<8x32xf32>
      %59 = arith.addf %44, %58 : vector<8x32xf32>
      %cst_37 = arith.constant 0.000000e+00 : f32
      %60 = vector.broadcast %cst_37 : f32 to vector<8x32xf32>
      %61 = arith.subf %60, %59 : vector<8x32xf32>
      %62 = math.exp %61 : vector<8x32xf32>
      %cst_38 = arith.constant 1.000000e+00 : f32
      %63 = vector.broadcast %cst_38 : f32 to vector<8x32xf32>
      %64 = arith.addf %63, %62 : vector<8x32xf32>
      %65 = tpu.reciprocal %64 {approx = true} : vector<8x32xf32> -> vector<8x32xf32>
      %66 = vector.shape_cast %65 : vector<8x32xf32> to vector<8x1x32xf32>
      %c0_39 = arith.constant 0 : index
      %c0_40 = arith.constant 0 : index
      %c0_41 = arith.constant 0 : index
      %67 = vector.load %arg5[%c0_39, %c0_40, %c0_41] : memref<8x1x32xf32, #tpu.memory_space<vmem>>, vector<8x1x32xf32>
      tpu.vector_store %arg5[%c0_39, %c0_40, %c0_41], %66 {strides = array<i32>} : memref<8x1x32xf32, #tpu.memory_space<vmem>>, vector<8x1x32xf32>,
    } else {
    }
    return
  }
  func.func @transform_0(%arg0: i32, %arg1: i32) -> (i32, i32, i32) {
    %c0_i32 = arith.constant 0 : i32
    %c0_i32_0 = arith.constant 0 : i32
    return %arg0, %c0_i32, %arg1 : i32, i32, i32
  }
  func.func @transform_1(%arg0: i32, %arg1: i32) -> (i32, i32) {
    %c0_i32 = arith.constant 0 : i32
    %c0_i32_0 = arith.constant 0 : i32
    %c0_i32_1 = arith.constant 0 : i32
    return %c0_i32, %c0_i32_0 : i32, i32
  }
  func.func @transform_2(%arg0: i32, %arg1: i32) -> (i32, i32) {
    %c0_i32 = arith.constant 0 : i32
    %c0_i32_0 = arith.constant 0 : i32
    %c0_i32_1 = arith.constant 0 : i32
    return %c0_i32, %c0_i32_0 : i32, i32
  }
  func.func @transform_3(%arg0: i32, %arg1: i32) -> (i32, i32, i32) {
    %c0_i32 = arith.constant 0 : i32
    %c0_i32_0 = arith.constant 0 : i32
    %c0_i32_1 = arith.constant 0 : i32
    return %arg0, %c0_i32, %c0_i32_0 : i32, i32, i32
  }
}

</mosaic_0001>

<llo_original>
// kernel: tpu_custom_call.1
$region0: #{tpu_custom_call.1}
  #allocation0 [shape = 'u32[]', space=smem, size = 0x4, offset = 0x4, fixed_abs, tag = 'smem constant byte address 0x4 - core index']
  #allocation1 [shape = 'u32[144,128]{1,0:T(1,128)}', space=vmem, size = 0x12000, scoped, tag = 'internal scratch']
  #allocation2 [shape = 'f32[8,32]{1,0:T(8,128)}', space=vmem, size = 0x1000, scoped, tag = 'scratch operand']
  #allocation3 [shape = 'f32[8,32]{1,0:T(8,128)}', space=vmem, size = 0x1000, scoped, tag = 'scratch operand']
  %s0 = inlined_call_operand.hbm [shape: f32[8,32,256], index: 0, kind: input, shape index: {}]
  %s1 = inlined_call_operand.vmem [shape: f32[2,32], index: 1, kind: input, shape index: {}]
  %s2 = inlined_call_operand.vmem [shape: f32[2,32], index: 2, kind: input, shape index: {}]
  %s3 = inlined_call_operand.hbm [shape: f32[8,1,32], index: 3, kind: output, shape index: {}]
  %s4 = sld [smem:[#allocation0]]
  $region34: #{tpu_custom_call.1} parent=0
    _
  %s6 = ssub.s32 1, %s4
  %s7 = scalar_select 0, %s6, %s4
  $region1: #{tpu_custom_call.1} parent=0
    #allocation4 [shape = 'u8[262144]{0}', space=vmem, size = 0x40000, scoped, tag = 'input window, operand 0, single buffered']
    #allocation5 [shape = 's32[1]{0}', space=sflag, size = 0x4, scoped, tag = 'scoped memory for tpu_custom_call.1']
    #allocation6 [shape = 's32[1]{0}', space=sflag, size = 0x4, scoped, tag = 'scoped memory for tpu_custom_call.1']
    #allocation7 [shape = 'u8[4096]{0}', space=vmem, size = 0x1000, scoped, tag = 'output window, operand 0, single buffered']
    %8 = vsyncpa [#allocation5], 0
    %9 = vsyncpa [#allocation6], 0
    // Predicated region
    $region2: #{tpu_custom_call.1} parent=1 // pred_check
      _
    $region3: #{tpu_custom_call.1} parent=1 // pred_check_branch
      %11 = sbr.rel (0) target = $region5
    $region4: #{tpu_custom_call.1} parent=1 // pred_region
      %s13 = ssub.s32 8192, 8192
      %14 = vsyncadd [#allocation5], %s13
      %s15 = sshll.u32 [#allocation4], 4
      %s16 = int_to_ptr.vmem [resolvable:$true] %s15
      %21 = dma.hbm_to_vmem [thread:$0]  %s0, 8192, %s16, [#allocation5], 256, 256, 16
    $region5: #{tpu_custom_call.1} parent=1 // pred_fallthru
      _
    // Predicated region
    $region6: #{tpu_custom_call.1} parent=1 // pred_check
      _
    $region7: #{tpu_custom_call.1} parent=1 // pred_check_branch
      %23 = sbr.rel (0) target = $region9
    $region8: #{tpu_custom_call.1} parent=1 // pred_region
      _
    $region9: #{tpu_custom_call.1} parent=1 // pred_fallthru
      _
    // Predicated region
    $region10: #{tpu_custom_call.1} parent=1 // pred_check
      _
    $region11: #{tpu_custom_call.1} parent=1 // pred_check_branch
      %25 = sbr.rel (0) target = $region13
    $region12: #{tpu_custom_call.1} parent=1 // pred_region
      _
    $region13: #{tpu_custom_call.1} parent=1 // pred_fallthru
      _
    // Predicated region
    $region14: #{tpu_custom_call.1} parent=1 // pred_check
      _
    $region15: #{tpu_custom_call.1} parent=1 // pred_check_branch
      %27 = sbr.rel (0) target = $region17
    $region16: #{tpu_custom_call.1} parent=1 // pred_region
      %28 = dma.done [#allocation5], 8192
    $region17: #{tpu_custom_call.1} parent=1 // pred_fallthru
      _
    %p29 = scmp.eq.s32.totalorder 0, 0
    // Predicated region
    $region18: #{tpu_custom_call.1} parent=1 // pred_check
      %p30 = pneg %p29
    $region19: #{tpu_custom_call.1} parent=1 // pred_check_branch
      %32 = sbr.rel (%p30) target = $region21
    $region20: #{tpu_custom_call.1} parent=1 // pred_region
      %vm33 = vcmask 261120
      %34 = vst.msk [vmem:[#allocation2] sm:$0xff] %vm33, 0.0
      %35 = vst.msk [vmem:[#allocation3] sm:$0xff] %vm33, -inf
    $region21: #{tpu_custom_call.1} parent=1 // pred_fallthru
      _
    %v36 = vld [vmem:[#allocation4] sm:$0xff]
    %v37 = vld [vmem:[#allocation4 + $0x10] sm:$0xff]
    %v38 = vld [vmem:[#allocation4 + $0x20] sm:$0xff]
    %v39 = vld [vmem:[#allocation4 + $0x30] sm:$0xff]
    %v40 = vld [vmem:[#allocation4 + $0x40] sm:$0xff]
    %v41 = vld [vmem:[#allocation4 + $0x50] sm:$0xff]
    %v42 = vld [vmem:[#allocation4 + $0x60] sm:$0xff]
    %v43 = vld [vmem:[#allocation4 + $0x70] sm:$0xff]
    %v44 = vld [vmem:[#allocation4 + $0x80] sm:$0xff]
    %v45 = vld [vmem:[#allocation4 + $0x90] sm:$0xff]
    %v46 = vld [vmem:[#allocation4 + $0xa0] sm:$0xff]
    %v47 = vld [vmem:[#allocation4 + $0xb0] sm:$0xff]
    %v48 = vld [vmem:[#allocation4 + $0xc0] sm:$0xff]
    %v49 = vld [vmem:[#allocation4 + $0xd0] sm:$0xff]
    %v50 = vld [vmem:[#allocation4 + $0xe0] sm:$0xff]
    %v51 = vld [vmem:[#allocation4 + $0xf0] sm:$0xff]
    %v52 = vld [vmem:[#allocation4 + $0x100] sm:$0xff]
    %v53 = vld [vmem:[#allocation4 + $0x110] sm:$0xff]
    %v54 = vld [vmem:[#allocation4 + $0x120] sm:$0xff]
    %v55 = vld [vmem:[#allocation4 + $0x130] sm:$0xff]
    %v56 = vld [vmem:[#allocation4 + $0x140] sm:$0xff]
    %v57 = vld [vmem:[#allocation4 + $0x150] sm:$0xff]
    %v58 = vld [vmem:[#allocation4 + $0x160] sm:$0xff]
    %v59 = vld [vmem:[#allocation4 + $0x170] sm:$0xff]
    %v60 = vld [vmem:[#allocation4 + $0x180] sm:$0xff]
    %v61 = vld [vmem:[#allocation4 + $0x190] sm:$0xff]
    %v62 = vld [vmem:[#allocation4 + $0x1a0] sm:$0xff]
    %v63 = vld [vmem:[#allocation4 + $0x1b0] sm:$0xff]
    %v64 = vld [vmem:[#allocation4 + $0x1c0] sm:$0xff]
    %v65 = vld [vmem:[#allocation4 + $0x1d0] sm:$0xff]
    %v66 = vld [vmem:[#allocation4 + $0x1e0] sm:$0xff]
    %v67 = vld [vmem:[#allocation4 + $0x1f0] sm:$0xff]
    %68 = vadd.xlane.f32.xlu0 %v36
    %v69 = vpop.xlane.xlu0 %68
    %70 = vadd.xlane.f32.xlu0 %v37
    %v71 = vpop.xlane.xlu0 %70
    %72 = vadd.xlane.f32.xlu0 %v38
    %v73 = vpop.xlane.xlu0 %72
    %74 = vadd.xlane.f32.xlu0 %v39
    %v75 = vpop.xlane.xlu0 %74
    %76 = vadd.xlane.f32.xlu0 %v40
    %v77 = vpop.xlane.xlu0 %76
    %78 = vadd.xlane.f32.xlu0 %v41
    %v79 = vpop.xlane.xlu0 %78
    %80 = vadd.xlane.f32.xlu0 %v42
    %v81 = vpop.xlane.xlu0 %80
    %82 = vadd.xlane.f32.xlu0 %v43
    %v83 = vpop.xlane.xlu0 %82
    %84 = vadd.xlane.f32.xlu0 %v44
    %v85 = vpop.xlane.xlu0 %84
    %86 = vadd.xlane.f32.xlu0 %v45
    %v87 = vpop.xlane.xlu0 %86
    %88 = vadd.xlane.f32.xlu0 %v46
    %v89 = vpop.xlane.xlu0 %88
    %90 = vadd.xlane.f32.xlu0 %v47
    %v91 = vpop.xlane.xlu0 %90
    %92 = vadd.xlane.f32.xlu0 %v48
    %v93 = vpop.xlane.xlu0 %92
    %94 = vadd.xlane.f32.xlu0 %v49
    %v95 = vpop.xlane.xlu0 %94
    %96 = vadd.xlane.f32.xlu0 %v50
    %v97 = vpop.xlane.xlu0 %96
    %98 = vadd.xlane.f32.xlu0 %v51
    %v99 = vpop.xlane.xlu0 %98
    %100 = vadd.xlane.f32.xlu0 %v52
    %v101 = vpop.xlane.xlu0 %100
    %102 = vadd.xlane.f32.xlu0 %v53
    %v103 = vpop.xlane.xlu0 %102
    %104 = vadd.xlane.f32.xlu0 %v54
    %v105 = vpop.xlane.xlu0 %104
    %106 = vadd.xlane.f32.xlu0 %v55
    %v107 = vpop.xlane.xlu0 %106
    %108 = vadd.xlane.f32.xlu0 %v56
    %v109 = vpop.xlane.xlu0 %108
    %110 = vadd.xlane.f32.xlu0 %v57
    %v111 = vpop.xlane.xlu0 %110
    %112 = vadd.xlane.f32.xlu0 %v58
    %v113 = vpop.xlane.xlu0 %112
    %114 = vadd.xlane.f32.xlu0 %v59
    %v115 = vpop.xlane.xlu0 %114
    %116 = vadd.xlane.f32.xlu0 %v60
    %v117 = vpop.xlane.xlu0 %116
    %118 = vadd.xlane.f32.xlu0 %v61
    %v119 = vpop.xlane.xlu0 %118
    %120 = vadd.xlane.f32.xlu0 %v62
    %v121 = vpop.xlane.xlu0 %120
    %122 = vadd.xlane.f32.xlu0 %v63
    %v123 = vpop.xlane.xlu0 %122
    %124 = vadd.xlane.f32.xlu0 %v64
    %v125 = vpop.xlane.xlu0 %124
    %126 = vadd.xlane.f32.xlu0 %v65
    %v127 = vpop.xlane.xlu0 %126
    %128 = vadd.xlane.f32.xlu0 %v66
    %v129 = vpop.xlane.xlu0 %128
    %130 = vadd.xlane.f32.xlu0 %v67
    %v131 = vpop.xlane.xlu0 %130
    %v132 = vadd.f32 %v69, 0.0
    %v133 = vadd.f32 %v71, 0.0
    %v134 = vadd.f32 %v73, 0.0
    %v135 = vadd.f32 %v75, 0.0
    %v136 = vadd.f32 %v77, 0.0
    %v137 = vadd.f32 %v79, 0.0
    %v138 = vadd.f32 %v81, 0.0
    %v139 = vadd.f32 %v83, 0.0
    %v140 = vadd.f32 %v85, 0.0
    %v141 = vadd.f32 %v87, 0.0
    %v142 = vadd.f32 %v89, 0.0
    %v143 = vadd.f32 %v91, 0.0
    %v144 = vadd.f32 %v93, 0.0
    %v145 = vadd.f32 %v95, 0.0
    %v146 = vadd.f32 %v97, 0.0
    %v147 = vadd.f32 %v99, 0.0
    %v148 = vadd.f32 %v101, 0.0
    %v149 = vadd.f32 %v103, 0.0
    %v150 = vadd.f32 %v105, 0.0
    %v151 = vadd.f32 %v107, 0.0
    %v152 = vadd.f32 %v109, 0.0
    %v153 = vadd.f32 %v111, 0.0
    %v154 = vadd.f32 %v113, 0.0
    %v155 = vadd.f32 %v115, 0.0
    %v156 = vadd.f32 %v117, 0.0
    %v157 = vadd.f32 %v119, 0.0
    %v158 = vadd.f32 %v121, 0.0
    %v159 = vadd.f32 %v123, 0.0
    %v160 = vadd.f32 %v125, 0.0
    %v161 = vadd.f32 %v127, 0.0
    %v162 = vadd.f32 %v129, 0.0
    %v163 = vadd.f32 %v131, 0.0
    %164 = vmax.xlane.f32.xlu0 %v36
    %v165 = vpop.xlane.xlu0 %164
    %166 = vmax.xlane.f32.xlu0 %v37
    %v167 = vpop.xlane.xlu0 %166
    %168 = vmax.xlane.f32.xlu0 %v38
    %v169 = vpop.xlane.xlu0 %168
    %170 = vmax.xlane.f32.xlu0 %v39
    %v171 = vpop.xlane.xlu0 %170
    %172 = vmax.xlane.f32.xlu0 %v40
    %v173 = vpop.xlane.xlu0 %172
    %174 = vmax.xlane.f32.xlu0 %v41
    %v175 = vpop.xlane.xlu0 %174
    %176 = vmax.xlane.f32.xlu0 %v42
    %v177 = vpop.xlane.xlu0 %176
    %178 = vmax.xlane.f32.xlu0 %v43
    %v179 = vpop.xlane.xlu0 %178
    %180 = vmax.xlane.f32.xlu0 %v44
    %v181 = vpop.xlane.xlu0 %180
    %182 = vmax.xlane.f32.xlu0 %v45
    %v183 = vpop.xlane.xlu0 %182
    %184 = vmax.xlane.f32.xlu0 %v46
    %v185 = vpop.xlane.xlu0 %184
    %186 = vmax.xlane.f32.xlu0 %v47
    %v187 = vpop.xlane.xlu0 %186
    %188 = vmax.xlane.f32.xlu0 %v48
    %v189 = vpop.xlane.xlu0 %188
    %190 = vmax.xlane.f32.xlu0 %v49
    %v191 = vpop.xlane.xlu0 %190
    %192 = vmax.xlane.f32.xlu0 %v50
    %v193 = vpop.xlane.xlu0 %192
    %194 = vmax.xlane.f32.xlu0 %v51
    %v195 = vpop.xlane.xlu0 %194
    %196 = vmax.xlane.f32.xlu0 %v52
    %v197 = vpop.xlane.xlu0 %196
    %198 = vmax.xlane.f32.xlu0 %v53
    %v199 = vpop.xlane.xlu0 %198
    %200 = vmax.xlane.f32.xlu0 %v54
    %v201 = vpop.xlane.xlu0 %200
    %202 = vmax.xlane.f32.xlu0 %v55
    %v203 = vpop.xlane.xlu0 %202
    %204 = vmax.xlane.f32.xlu0 %v56
    %v205 = vpop.xlane.xlu0 %204
    %206 = vmax.xlane.f32.xlu0 %v57
    %v207 = vpop.xlane.xlu0 %206
    %208 = vmax.xlane.f32.xlu0 %v58
    %v209 = vpop.xlane.xlu0 %208
    %210 = vmax.xlane.f32.xlu0 %v59
    %v211 = vpop.xlane.xlu0 %210
    %212 = vmax.xlane.f32.xlu0 %v60
    %v213 = vpop.xlane.xlu0 %212
    %214 = vmax.xlane.f32.xlu0 %v61
    %v215 = vpop.xlane.xlu0 %214
    %216 = vmax.xlane.f32.xlu0 %v62
    %v217 = vpop.xlane.xlu0 %216
    %218 = vmax.xlane.f32.xlu0 %v63
    %v219 = vpop.xlane.xlu0 %218
    %220 = vmax.xlane.f32.xlu0 %v64
    %v221 = vpop.xlane.xlu0 %220
    %222 = vmax.xlane.f32.xlu0 %v65
    %v223 = vpop.xlane.xlu0 %222
    %224 = vmax.xlane.f32.xlu0 %v66
    %v225 = vpop.xlane.xlu0 %224
    %226 = vmax.xlane.f32.xlu0 %v67
    %v227 = vpop.xlane.xlu0 %226
    %v228 = vld [vmem:[#allocation4 + $0x8] sm:$0xff]
    %v229 = vld [vmem:[#allocation4 + $0x18] sm:$0xff]
    %v230 = vld [vmem:[#allocation4 + $0x28] sm:$0xff]
    %v231 = vld [vmem:[#allocation4 + $0x38] sm:$0xff]
    %v232 = vld [vmem:[#allocation4 + $0x48] sm:$0xff]
    %v233 = vld [vmem:[#allocation4 + $0x58] sm:$0xff]
    %v234 = vld [vmem:[#allocation4 + $0x68] sm:$0xff]
    %v235 = vld [vmem:[#allocation4 + $0x78] sm:$0xff]
    %v236 = vld [vmem:[#allocation4 + $0x88] sm:$0xff]
    %v237 = vld [vmem:[#allocation4 + $0x98] sm:$0xff]
    %v238 = vld [vmem:[#allocation4 + $0xa8] sm:$0xff]
    %v239 = vld [vmem:[#allocation4 + $0xb8] sm:$0xff]
    %v240 = vld [vmem:[#allocation4 + $0xc8] sm:$0xff]
    %v241 = vld [vmem:[#allocation4 + $0xd8] sm:$0xff]
    %v242 = vld [vmem:[#allocation4 + $0xe8] sm:$0xff]
    %v243 = vld [vmem:[#allocation4 + $0xf8] sm:$0xff]
    %v244 = vld [vmem:[#allocation4 + $0x108] sm:$0xff]
    %v245 = vld [vmem:[#allocation4 + $0x118] sm:$0xff]
    %v246 = vld [vmem:[#allocation4 + $0x128] sm:$0xff]
    %v247 = vld [vmem:[#allocation4 + $0x138] sm:$0xff]
    %v248 = vld [vmem:[#allocation4 + $0x148] sm:$0xff]
    %v249 = vld [vmem:[#allocation4 + $0x158] sm:$0xff]
    %v250 = vld [vmem:[#allocation4 + $0x168] sm:$0xff]
    %v251 = vld [vmem:[#allocation4 + $0x178] sm:$0xff]
    %v252 = vld [vmem:[#allocation4 + $0x188] sm:$0xff]
    %v253 = vld [vmem:[#allocation4 + $0x198] sm:$0xff]
    %v254 = vld [vmem:[#allocation4 + $0x1a8] sm:$0xff]
    %v255 = vld [vmem:[#allocation4 + $0x1b8] sm:$0xff]
    %v256 = vld [vmem:[#allocation4 + $0x1c8] sm:$0xff]
    %v257 = vld [vmem:[#allocation4 + $0x1d8] sm:$0xff]
    %v258 = vld [vmem:[#allocation4 + $0x1e8] sm:$0xff]
    %v259 = vld [vmem:[#allocation4 + $0x1f8] sm:$0xff]
    %260 = vadd.xlane.f32.xlu0 %v228
    %v261 = vpop.xlane.xlu0 %260
    %262 = vadd.xlane.f32.xlu0 %v229
    %v263 = vpop.xlane.xlu0 %262
    %264 = vadd.xlane.f32.xlu0 %v230
    %v265 = vpop.xlane.xlu0 %264
    %266 = vadd.xlane.f32.xlu0 %v231
    %v267 = vpop.xlane.xlu0 %266
    %268 = vadd.xlane.f32.xlu0 %v232
    %v269 = vpop.xlane.xlu0 %268
    %270 = vadd.xlane.f32.xlu0 %v233
    %v271 = vpop.xlane.xlu0 %270
    %272 = vadd.xlane.f32.xlu0 %v234
    %v273 = vpop.xlane.xlu0 %272
    %274 = vadd.xlane.f32.xlu0 %v235
    %v275 = vpop.xlane.xlu0 %274
    %276 = vadd.xlane.f32.xlu0 %v236
    %v277 = vpop.xlane.xlu0 %276
    %278 = vadd.xlane.f32.xlu0 %v237
    %v279 = vpop.xlane.xlu0 %278
    %280 = vadd.xlane.f32.xlu0 %v238
    %v281 = vpop.xlane.xlu0 %280
    %282 = vadd.xlane.f32.xlu0 %v239
    %v283 = vpop.xlane.xlu0 %282
    %284 = vadd.xlane.f32.xlu0 %v240
    %v285 = vpop.xlane.xlu0 %284
    %286 = vadd.xlane.f32.xlu0 %v241
    %v287 = vpop.xlane.xlu0 %286
    %288 = vadd.xlane.f32.xlu0 %v242
    %v289 = vpop.xlane.xlu0 %288
    %290 = vadd.xlane.f32.xlu0 %v243
    %v291 = vpop.xlane.xlu0 %290
    %292 = vadd.xlane.f32.xlu0 %v244
    %v293 = vpop.xlane.xlu0 %292
    %294 = vadd.xlane.f32.xlu0 %v245
    %v295 = vpop.xlane.xlu0 %294
    %296 = vadd.xlane.f32.xlu0 %v246
    %v297 = vpop.xlane.xlu0 %296
    %298 = vadd.xlane.f32.xlu0 %v247
    %v299 = vpop.xlane.xlu0 %298
    %300 = vadd.xlane.f32.xlu0 %v248
    %v301 = vpop.xlane.xlu0 %300
    %302 = vadd.xlane.f32.xlu0 %v249
    %v303 = vpop.xlane.xlu0 %302
    %304 = vadd.xlane.f32.xlu0 %v250
    %v305 = vpop.xlane.xlu0 %304
    %306 = vadd.xlane.f32.xlu0 %v251
    %v307 = vpop.xlane.xlu0 %306
    %308 = vadd.xlane.f32.xlu0 %v252
    %v309 = vpop.xlane.xlu0 %308
    %310 = vadd.xlane.f32.xlu0 %v253
    %v311 = vpop.xlane.xlu0 %310
    %312 = vadd.xlane.f32.xlu0 %v254
    %v313 = vpop.xlane.xlu0 %312
    %314 = vadd.xlane.f32.xlu0 %v255
    %v315 = vpop.xlane.xlu0 %314
    %316 = vadd.xlane.f32.xlu0 %v256
    %v317 = vpop.xlane.xlu0 %316
    %318 = vadd.xlane.f32.xlu0 %v257
    %v319 = vpop.xlane.xlu0 %318
    %320 = vadd.xlane.f32.xlu0 %v258
    %v321 = vpop.xlane.xlu0 %320
    %322 = vadd.xlane.f32.xlu0 %v259
    %v323 = vpop.xlane.xlu0 %322
    %v324 = vadd.f32 %v132, %v261
    %v325 = vadd.f32 %v133, %v263
    %v326 = vadd.f32 %v134, %v265
    %v327 = vadd.f32 %v135, %v267
    %v328 = vadd.f32 %v136, %v269
    %v329 = vadd.f32 %v137, %v271
    %v330 = vadd.f32 %v138, %v273
    %v331 = vadd.f32 %v139, %v275
    %v332 = vadd.f32 %v140, %v277
    %v333 = vadd.f32 %v141, %v279
    %v334 = vadd.f32 %v142, %v281
    %v335 = vadd.f32 %v143, %v283
    %v336 = vadd.f32 %v144, %v285
    %v337 = vadd.f32 %v145, %v287
    %v338 = vadd.f32 %v146, %v289
    %v339 = vadd.f32 %v147, %v291
    %v340 = vadd.f32 %v148, %v293
    %v341 = vadd.f32 %v149, %v295
    %v342 = vadd.f32 %v150, %v297
    %v343 = vadd.f32 %v151, %v299
    %v344 = vadd.f32 %v152, %v301
    %v345 = vadd.f32 %v153, %v303
    %v346 = vadd.f32 %v154, %v305
    %v347 = vadd.f32 %v155, %v307
    %v348 = vadd.f32 %v156, %v309
    %v349 = vadd.f32 %v157, %v311
    %v350 = vadd.f32 %v158, %v313
    %v351 = vadd.f32 %v159, %v315
    %v352 = vadd.f32 %v160, %v317
    %v353 = vadd.f32 %v161, %v319
    %v354 = vadd.f32 %v162, %v321
    %v355 = vadd.f32 %v163, %v323
    %356 = vmax.xlane.f32.xlu0 %v228
    %v357 = vpop.xlane.xlu0 %356
    %358 = vmax.xlane.f32.xlu0 %v229
    %v359 = vpop.xlane.xlu0 %358
    %360 = vmax.xlane.f32.xlu0 %v230
    %v361 = vpop.xlane.xlu0 %360
    %362 = vmax.xlane.f32.xlu0 %v231
    %v363 = vpop.xlane.xlu0 %362
    %364 = vmax.xlane.f32.xlu0 %v232
    %v365 = vpop.xlane.xlu0 %364
    %366 = vmax.xlane.f32.xlu0 %v233
    %v367 = vpop.xlane.xlu0 %366
    %368 = vmax.xlane.f32.xlu0 %v234
    %v369 = vpop.xlane.xlu0 %368
    %370 = vmax.xlane.f32.xlu0 %v235
    %v371 = vpop.xlane.xlu0 %370
    %372 = vmax.xlane.f32.xlu0 %v236
    %v373 = vpop.xlane.xlu0 %372
    %374 = vmax.xlane.f32.xlu0 %v237
    %v375 = vpop.xlane.xlu0 %374
    %376 = vmax.xlane.f32.xlu0 %v238
    %v377 = vpop.xlane.xlu0 %376
    %378 = vmax.xlane.f32.xlu0 %v239
    %v379 = vpop.xlane.xlu0 %378
    %380 = vmax.xlane.f32.xlu0 %v240
    %v381 = vpop.xlane.xlu0 %380
    %382 = vmax.xlane.f32.xlu0 %v241
    %v383 = vpop.xlane.xlu0 %382
    %384 = vmax.xlane.f32.xlu0 %v242
    %v385 = vpop.xlane.xlu0 %384
    %386 = vmax.xlane.f32.xlu0 %v243
    %v387 = vpop.xlane.xlu0 %386
    %388 = vmax.xlane.f32.xlu0 %v244
    %v389 = vpop.xlane.xlu0 %388
    %390 = vmax.xlane.f32.xlu0 %v245
    %v391 = vpop.xlane.xlu0 %390
    %392 = vmax.xlane.f32.xlu0 %v246
    %v393 = vpop.xlane.xlu0 %392
    %394 = vmax.xlane.f32.xlu0 %v247
    %v395 = vpop.xlane.xlu0 %394
    %396 = vmax.xlane.f32.xlu0 %v248
    %v397 = vpop.xlane.xlu0 %396
    %398 = vmax.xlane.f32.xlu0 %v249
    %v399 = vpop.xlane.xlu0 %398
    %400 = vmax.xlane.f32.xlu0 %v250
    %v401 = vpop.xlane.xlu0 %400
    %402 = vmax.xlane.f32.xlu0 %v251
    %v403 = vpop.xlane.xlu0 %402
    %404 = vmax.xlane.f32.xlu0 %v252
    %v405 = vpop.xlane.xlu0 %404
    %406 = vmax.xlane.f32.xlu0 %v253
    %v407 = vpop.xlane.xlu0 %406
    %408 = vmax.xlane.f32.xlu0 %v254
    %v409 = vpop.xlane.xlu0 %408
    %410 = vmax.xlane.f32.xlu0 %v255
    %v411 = vpop.xlane.xlu0 %410
    %412 = vmax.xlane.f32.xlu0 %v256
    %v413 = vpop.xlane.xlu0 %412
    %414 = vmax.xlane.f32.xlu0 %v257
    %v415 = vpop.xlane.xlu0 %414
    %416 = vmax.xlane.f32.xlu0 %v258
    %v417 = vpop.xlane.xlu0 %416
    %418 = vmax.xlane.f32.xlu0 %v259
    %v419 = vpop.xlane.xlu0 %418
    %v420 = vmax.f32 %v165, %v357
    %v421 = vmax.f32 %v167, %v359
    %v422 = vmax.f32 %v169, %v361
    %v423 = vmax.f32 %v171, %v363
    %v424 = vmax.f32 %v173, %v365
    %v425 = vmax.f32 %v175, %v367
    %v426 = vmax.f32 %v177, %v369
    %v427 = vmax.f32 %v179, %v371
    %v428 = vmax.f32 %v181, %v373
    %v429 = vmax.f32 %v183, %v375
    %v430 = vmax.f32 %v185, %v377
    %v431 = vmax.f32 %v187, %v379
    %v432 = vmax.f32 %v189, %v381
    %v433 = vmax.f32 %v191, %v383
    %v434 = vmax.f32 %v193, %v385
    %v435 = vmax.f32 %v195, %v387
    %v436 = vmax.f32 %v197, %v389
    %v437 = vmax.f32 %v199, %v391
    %v438 = vmax.f32 %v201, %v393
    %v439 = vmax.f32 %v203, %v395
    %v440 = vmax.f32 %v205, %v397
    %v441 = vmax.f32 %v207, %v399
    %v442 = vmax.f32 %v209, %v401
    %v443 = vmax.f32 %v211, %v403
    %v444 = vmax.f32 %v213, %v405
    %v445 = vmax.f32 %v215, %v407
    %v446 = vmax.f32 %v217, %v409
    %v447 = vmax.f32 %v219, %v411
    %v448 = vmax.f32 %v221, %v413
    %v449 = vmax.f32 %v223, %v415
    %v450 = vmax.f32 %v225, %v417
    %v451 = vmax.f32 %v227, %v419
    %v452 = vld [vmem:[#allocation2] sm:$0xff]
    %v485 = vlaneseq
    %v486 = vand.u32 %v485, 127
    %v487 = vlaneseq
    %v488 = vshrl.u32 %v487, 7
    %v489 = vsub.s32 %v486, %v488
    %v490 = vrot.slane %v324, %v489
    %v491 = vadd.s32 %v486, 4294967288
    %v492 = vlaneseq
    %v493 = vshrl.u32 %v492, 7
    %v494 = vsub.s32 %v491, %v493
    %v495 = vrot.slane %v325, %v494
    %vm496 = vcmask 130112
    %v497 = vsel %vm496, %v495, %v490
    %v498 = vadd.s32 %v486, 4294967280
    %v499 = vlaneseq
    %v500 = vshrl.u32 %v499, 7
    %v501 = vsub.s32 %v498, %v500
    %v502 = vrot.slane %v326, %v501
    %vm503 = vcmask 195712
    %v504 = vsel %vm503, %v502, %v497
    %v505 = vadd.s32 %v486, 4294967272
    %v506 = vlaneseq
    %v507 = vshrl.u32 %v506, 7
    %v508 = vsub.s32 %v505, %v507
    %v509 = vrot.slane %v327, %v508
    %vm510 = vcmask 261312
    %v511 = vsel %vm510, %v509, %v504
    %v512 = vlaneseq
    %v513 = vshrl.u32 %v512, 7
    %v514 = vsub.s32 %v486, %v513
    %v515 = vrot.slane %v328, %v514
    %v516 = vlaneseq
    %v517 = vshrl.u32 %v516, 7
    %v518 = vsub.s32 %v491, %v517
    %v519 = vrot.slane %v329, %v518
    %v520 = vsel %vm496, %v519, %v515
    %v521 = vlaneseq
    %v522 = vshrl.u32 %v521, 7
    %v523 = vsub.s32 %v498, %v522
    %v524 = vrot.slane %v330, %v523
    %v525 = vsel %vm503, %v524, %v520
    %v526 = vlaneseq
    %v527 = vshrl.u32 %v526, 7
    %v528 = vsub.s32 %v505, %v527
    %v529 = vrot.slane %v331, %v528
    %v530 = vsel %vm510, %v529, %v525
    %v531 = vlaneseq
    %v532 = vshrl.u32 %v531, 7
    %v533 = vsub.s32 %v486, %v532
    %v534 = vrot.slane %v332, %v533
    %v535 = vlaneseq
    %v536 = vshrl.u32 %v535, 7
    %v537 = vsub.s32 %v491, %v536
    %v538 = vrot.slane %v333, %v537
    %v539 = vsel %vm496, %v538, %v534
    %v540 = vlaneseq
    %v541 = vshrl.u32 %v540, 7
    %v542 = vsub.s32 %v498, %v541
    %v543 = vrot.slane %v334, %v542
    %v544 = vsel %vm503, %v543, %v539
    %v545 = vlaneseq
    %v546 = vshrl.u32 %v545, 7
    %v547 = vsub.s32 %v505, %v546
    %v548 = vrot.slane %v335, %v547
    %v549 = vsel %vm510, %v548, %v544
    %v550 = vlaneseq
    %v551 = vshrl.u32 %v550, 7
    %v552 = vsub.s32 %v486, %v551
    %v553 = vrot.slane %v336, %v552
    %v554 = vlaneseq
    %v555 = vshrl.u32 %v554, 7
    %v556 = vsub.s32 %v491, %v555
    %v557 = vrot.slane %v337, %v556
    %v558 = vsel %vm496, %v557, %v553
    %v559 = vlaneseq
    %v560 = vshrl.u32 %v559, 7
    %v561 = vsub.s32 %v498, %v560
    %v562 = vrot.slane %v338, %v561
    %v563 = vsel %vm503, %v562, %v558
    %v564 = vlaneseq
    %v565 = vshrl.u32 %v564, 7
    %v566 = vsub.s32 %v505, %v565
    %v567 = vrot.slane %v339, %v566
    %v568 = vsel %vm510, %v567, %v563
    %v569 = vlaneseq
    %v570 = vshrl.u32 %v569, 7
    %v571 = vsub.s32 %v486, %v570
    %v572 = vrot.slane %v340, %v571
    %v573 = vlaneseq
    %v574 = vshrl.u32 %v573, 7
    %v575 = vsub.s32 %v491, %v574
    %v576 = vrot.slane %v341, %v575
    %v577 = vsel %vm496, %v576, %v572
    %v578 = vlaneseq
    %v579 = vshrl.u32 %v578, 7
    %v580 = vsub.s32 %v498, %v579
    %v581 = vrot.slane %v342, %v580
    %v582 = vsel %vm503, %v581, %v577
    %v583 = vlaneseq
    %v584 = vshrl.u32 %v583, 7
    %v585 = vsub.s32 %v505, %v584
    %v586 = vrot.slane %v343, %v585
    %v587 = vsel %vm510, %v586, %v582
    %v588 = vlaneseq
    %v589 = vshrl.u32 %v588, 7
    %v590 = vsub.s32 %v486, %v589
    %v591 = vrot.slane %v344, %v590
    %v592 = vlaneseq
    %v593 = vshrl.u32 %v592, 7
    %v594 = vsub.s32 %v491, %v593
    %v595 = vrot.slane %v345, %v594
    %v596 = vsel %vm496, %v595, %v591
    %v597 = vlaneseq
    %v598 = vshrl.u32 %v597, 7
    %v599 = vsub.s32 %v498, %v598
    %v600 = vrot.slane %v346, %v599
    %v601 = vsel %vm503, %v600, %v596
    %v602 = vlaneseq
    %v603 = vshrl.u32 %v602, 7
    %v604 = vsub.s32 %v505, %v603
    %v605 = vrot.slane %v347, %v604
    %v606 = vsel %vm510, %v605, %v601
    %v607 = vlaneseq
    %v608 = vshrl.u32 %v607, 7
    %v609 = vsub.s32 %v486, %v608
    %v610 = vrot.slane %v348, %v609
    %v611 = vlaneseq
    %v612 = vshrl.u32 %v611, 7
    %v613 = vsub.s32 %v491, %v612
    %v614 = vrot.slane %v349, %v613
    %v615 = vsel %vm496, %v614, %v610
    %v616 = vlaneseq
    %v617 = vshrl.u32 %v616, 7
    %v618 = vsub.s32 %v498, %v617
    %v619 = vrot.slane %v350, %v618
    %v620 = vsel %vm503, %v619, %v615
    %v621 = vlaneseq
    %v622 = vshrl.u32 %v621, 7
    %v623 = vsub.s32 %v505, %v622
    %v624 = vrot.slane %v351, %v623
    %v625 = vsel %vm510, %v624, %v620
    %v626 = vlaneseq
    %v627 = vshrl.u32 %v626, 7
    %v628 = vsub.s32 %v486, %v627
    %v629 = vrot.slane %v352, %v628
    %v630 = vlaneseq
    %v631 = vshrl.u32 %v630, 7
    %v632 = vsub.s32 %v491, %v631
    %v633 = vrot.slane %v353, %v632
    %v634 = vsel %vm496, %v633, %v629
    %v635 = vlaneseq
    %v636 = vshrl.u32 %v635, 7
    %v637 = vsub.s32 %v498, %v636
    %v638 = vrot.slane %v354, %v637
    %v639 = vsel %vm503, %v638, %v634
    %v640 = vlaneseq
    %v641 = vshrl.u32 %v640, 7
    %v642 = vsub.s32 %v505, %v641
    %v643 = vrot.slane %v355, %v642
    %v644 = vsel %vm510, %v643, %v639
    %vm645 = vcmask 1041409
    %v646 = vsel %vm645, %v530, %v511
    %vm647 = vcmask 1042434
    %v648 = vsel %vm647, %v549, %v646
    %vm649 = vcmask 1043459
    %v650 = vsel %vm649, %v568, %v648
    %vm651 = vcmask 1044484
    %v652 = vsel %vm651, %v587, %v650
    %vm653 = vcmask 1045509
    %v654 = vsel %vm653, %v606, %v652
    %vm655 = vcmask 1046534
    %v656 = vsel %vm655, %v625, %v654
    %vm657 = vcmask 1047559
    %v658 = vsel %vm657, %v644, %v656
    %v660 = vadd.f32 %v452, %v658
    %vm661 = vcmask 261120
    %662 = vst.msk [vmem:[#allocation2] sm:$0xff] %vm661, %v660
    %v663 = vld [vmem:[#allocation3] sm:$0xff]
    %v696 = vlaneseq
    %v697 = vshrl.u32 %v696, 7
    %v698 = vsub.s32 %v486, %v697
    %v699 = vrot.slane %v420, %v698
    %v700 = vlaneseq
    %v701 = vshrl.u32 %v700, 7
    %v702 = vsub.s32 %v491, %v701
    %v703 = vrot.slane %v421, %v702
    %v704 = vsel %vm496, %v703, %v699
    %v705 = vlaneseq
    %v706 = vshrl.u32 %v705, 7
    %v707 = vsub.s32 %v498, %v706
    %v708 = vrot.slane %v422, %v707
    %v709 = vsel %vm503, %v708, %v704
    %v710 = vlaneseq
    %v711 = vshrl.u32 %v710, 7
    %v712 = vsub.s32 %v505, %v711
    %v713 = vrot.slane %v423, %v712
    %v714 = vsel %vm510, %v713, %v709
    %v715 = vlaneseq
    %v716 = vshrl.u32 %v715, 7
    %v717 = vsub.s32 %v486, %v716
    %v718 = vrot.slane %v424, %v717
    %v719 = vlaneseq
    %v720 = vshrl.u32 %v719, 7
    %v721 = vsub.s32 %v491, %v720
    %v722 = vrot.slane %v425, %v721
    %v723 = vsel %vm496, %v722, %v718
    %v724 = vlaneseq
    %v725 = vshrl.u32 %v724, 7
    %v726 = vsub.s32 %v498, %v725
    %v727 = vrot.slane %v426, %v726
    %v728 = vsel %vm503, %v727, %v723
    %v729 = vlaneseq
    %v730 = vshrl.u32 %v729, 7
    %v731 = vsub.s32 %v505, %v730
    %v732 = vrot.slane %v427, %v731
    %v733 = vsel %vm510, %v732, %v728
    %v734 = vlaneseq
    %v735 = vshrl.u32 %v734, 7
    %v736 = vsub.s32 %v486, %v735
    %v737 = vrot.slane %v428, %v736
    %v738 = vlaneseq
    %v739 = vshrl.u32 %v738, 7
    %v740 = vsub.s32 %v491, %v739
    %v741 = vrot.slane %v429, %v740
    %v742 = vsel %vm496, %v741, %v737
    %v743 = vlaneseq
    %v744 = vshrl.u32 %v743, 7
    %v745 = vsub.s32 %v498, %v744
    %v746 = vrot.slane %v430, %v745
    %v747 = vsel %vm503, %v746, %v742
    %v748 = vlaneseq
    %v749 = vshrl.u32 %v748, 7
    %v750 = vsub.s32 %v505, %v749
    %v751 = vrot.slane %v431, %v750
    %v752 = vsel %vm510, %v751, %v747
    %v753 = vlaneseq
    %v754 = vshrl.u32 %v753, 7
    %v755 = vsub.s32 %v486, %v754
    %v756 = vrot.slane %v432, %v755
    %v757 = vlaneseq
    %v758 = vshrl.u32 %v757, 7
    %v759 = vsub.s32 %v491, %v758
    %v760 = vrot.slane %v433, %v759
    %v761 = vsel %vm496, %v760, %v756
    %v762 = vlaneseq
    %v763 = vshrl.u32 %v762, 7
    %v764 = vsub.s32 %v498, %v763
    %v765 = vrot.slane %v434, %v764
    %v766 = vsel %vm503, %v765, %v761
    %v767 = vlaneseq
    %v768 = vshrl.u32 %v767, 7
    %v769 = vsub.s32 %v505, %v768
    %v770 = vrot.slane %v435, %v769
    %v771 = vsel %vm510, %v770, %v766
    %v772 = vlaneseq
    %v773 = vshrl.u32 %v772, 7
    %v774 = vsub.s32 %v486, %v773
    %v775 = vrot.slane %v436, %v774
    %v776 = vlaneseq
    %v777 = vshrl.u32 %v776, 7
    %v778 = vsub.s32 %v491, %v777
    %v779 = vrot.slane %v437, %v778
    %v780 = vsel %vm496, %v779, %v775
    %v781 = vlaneseq
    %v782 = vshrl.u32 %v781, 7
    %v783 = vsub.s32 %v498, %v782
    %v784 = vrot.slane %v438, %v783
    %v785 = vsel %vm503, %v784, %v780
    %v786 = vlaneseq
    %v787 = vshrl.u32 %v786, 7
    %v788 = vsub.s32 %v505, %v787
    %v789 = vrot.slane %v439, %v788
    %v790 = vsel %vm510, %v789, %v785
    %v791 = vlaneseq
    %v792 = vshrl.u32 %v791, 7
    %v793 = vsub.s32 %v486, %v792
    %v794 = vrot.slane %v440, %v793
    %v795 = vlaneseq
    %v796 = vshrl.u32 %v795, 7
    %v797 = vsub.s32 %v491, %v796
    %v798 = vrot.slane %v441, %v797
    %v799 = vsel %vm496, %v798, %v794
    %v800 = vlaneseq
    %v801 = vshrl.u32 %v800, 7
    %v802 = vsub.s32 %v498, %v801
    %v803 = vrot.slane %v442, %v802
    %v804 = vsel %vm503, %v803, %v799
    %v805 = vlaneseq
    %v806 = vshrl.u32 %v805, 7
    %v807 = vsub.s32 %v505, %v806
    %v808 = vrot.slane %v443, %v807
    %v809 = vsel %vm510, %v808, %v804
    %v810 = vlaneseq
    %v811 = vshrl.u32 %v810, 7
    %v812 = vsub.s32 %v486, %v811
    %v813 = vrot.slane %v444, %v812
    %v814 = vlaneseq
    %v815 = vshrl.u32 %v814, 7
    %v816 = vsub.s32 %v491, %v815
    %v817 = vrot.slane %v445, %v816
    %v818 = vsel %vm496, %v817, %v813
    %v819 = vlaneseq
    %v820 = vshrl.u32 %v819, 7
    %v821 = vsub.s32 %v498, %v820
    %v822 = vrot.slane %v446, %v821
    %v823 = vsel %vm503, %v822, %v818
    %v824 = vlaneseq
    %v825 = vshrl.u32 %v824, 7
    %v826 = vsub.s32 %v505, %v825
    %v827 = vrot.slane %v447, %v826
    %v828 = vsel %vm510, %v827, %v823
    %v829 = vlaneseq
    %v830 = vshrl.u32 %v829, 7
    %v831 = vsub.s32 %v486, %v830
    %v832 = vrot.slane %v448, %v831
    %v833 = vlaneseq
    %v834 = vshrl.u32 %v833, 7
    %v835 = vsub.s32 %v491, %v834
    %v836 = vrot.slane %v449, %v835
    %v837 = vsel %vm496, %v836, %v832
    %v838 = vlaneseq
    %v839 = vshrl.u32 %v838, 7
    %v840 = vsub.s32 %v498, %v839
    %v841 = vrot.slane %v450, %v840
    %v842 = vsel %vm503, %v841, %v837
    %v843 = vlaneseq
    %v844 = vshrl.u32 %v843, 7
    %v845 = vsub.s32 %v505, %v844
    %v846 = vrot.slane %v451, %v845
    %v847 = vsel %vm510, %v846, %v842
    %v848 = vsel %vm645, %v733, %v714
    %v849 = vsel %vm647, %v752, %v848
    %v850 = vsel %vm649, %v771, %v849
    %v851 = vsel %vm651, %v790, %v850
    %v852 = vsel %vm653, %v809, %v851
    %v853 = vsel %vm655, %v828, %v852
    %v854 = vsel %vm657, %v847, %v853
    %v856 = vmax.f32 %v663, %v854
    %857 = vst.msk [vmem:[#allocation3] sm:$0xff] %vm661, %v856
    // Predicated region
    $region22: #{tpu_custom_call.1} parent=1 // pred_check
      %p858 = pneg %p29
    $region23: #{tpu_custom_call.1} parent=1 // pred_check_branch
      %860 = sbr.rel (%p858) target = $region25
    $region24: #{tpu_custom_call.1} parent=1 // pred_region
      %v861 = vld [vmem:[#allocation2] sm:$0xff]
      %v862 = vmul.f32 %v861, 0.00390625
      %v863 = vld [vmem:[#allocation3] sm:$0xff]
      %v864 = vld [vmem:[%s1] sm:$0x1]
      %v865 = vlaneseq
      %v866 = vshrl.u32 %v865, 7
      %v867 = vsub.s32 0, %v866
      %v868 = vrot.slane %v864, %v867
      %v869 = vmul.f32 %v862, %v868
      %v870 = vmul.f32 %v863, %v868
      %v871 = vsel %vm661, %v869, 0.0
      %872 = vadd.xlane.f32.xlu0 %v871
      %v873 = vpop.xlane.xlu0 %872
      %v874 = vsel %vm661, %v870, 0.0
      %875 = vadd.xlane.f32.xlu0 %v874
      %v876 = vpop.xlane.xlu0 %875
      %v877 = vmax.f32 %v873, 0.0
      %v878 = vmax.f32 %v876, 0.0
      %v879 = vadd.f32 %v877, %v878
      %v880 = vld [vmem:[%s2] sm:$0x1]
      %v881 = vlaneseq
      %v882 = vshrl.u32 %v881, 7
      %v883 = vsub.s32 0, %v882
      %v884 = vrot.slane %v880, %v883
      %v885 = vmul.f32 %v879, %v884
      %v886 = vadd.f32 %v885, 0.0
      %v887 = vld [vmem:[%s1 + $0x1] sm:$0x1]
      %v888 = vlaneseq
      %v889 = vshrl.u32 %v888, 7
      %v890 = vsub.s32 0, %v889
      %v891 = vrot.slane %v887, %v890
      %v892 = vmul.f32 %v862, %v891
      %v893 = vmul.f32 %v863, %v891
      %v894 = vsel %vm661, %v892, 0.0
      %895 = vadd.xlane.f32.xlu0 %v894
      %v896 = vpop.xlane.xlu0 %895
      %v897 = vsel %vm661, %v893, 0.0
      %898 = vadd.xlane.f32.xlu0 %v897
      %v899 = vpop.xlane.xlu0 %898
      %v900 = vmax.f32 %v896, 0.0
      %v901 = vmax.f32 %v899, 0.0
      %v902 = vadd.f32 %v900, %v901
      %v903 = vld [vmem:[%s2 + $0x1] sm:$0x1]
      %v904 = vlaneseq
      %v905 = vshrl.u32 %v904, 7
      %v906 = vsub.s32 0, %v905
      %v907 = vrot.slane %v903, %v906
      %v908 = vmul.f32 %v902, %v907
      %v909 = vadd.f32 %v886, %v908
      %v910 = vsub.f32 0.0, %v909
      %v911 = vmul.f32 %v910, 1.442695
      %v912 = vpow.pop %v911
      %v913 = vadd.f32 %v912, 1.0
      %v914 = vrcp.pop %v913
      %v916 = vcombine.high %v914, %v914
      %v918 = vunpack.c.l.s4 1966171168
      %v919 = vunpack.c.0.s8 %v918
      %v920 = vlaneseq
      %v921 = vshrl.u32 %v920, 7
      %v922 = vsub.s32 %v919, %v921
      %v923 = vrot.slane %v914, %v922
      %v925 = vunpack.c.l.s4 1966171168
      %v926 = vunpack.c.0.s8 %v925
      %v927 = vlaneseq
      %v928 = vshrl.u32 %v927, 7
      %v929 = vsub.s32 %v926, %v928
      %v930 = vrot.slane %v916, %v929
      %v931 = vcombine.high %v923, %v923
      %v932 = vcombine.high %v930, %v930
      %v934 = vunpack.c.l.s4 1966171168
      %v935 = vunpack.c.0.s8 %v934
      %v936 = vlaneseq
      %v937 = vshrl.u32 %v936, 7
      %v938 = vsub.s32 %v935, %v937
      %v939 = vrot.slane %v923, %v938
      %v941 = vunpack.c.l.s4 1966171168
      %v942 = vunpack.c.0.s8 %v941
      %v943 = vlaneseq
      %v944 = vshrl.u32 %v943, 7
      %v945 = vsub.s32 %v942, %v944
      %v946 = vrot.slane %v930, %v945
      %v948 = vunpack.c.l.s4 1966171168
      %v949 = vunpack.c.0.s8 %v948
      %v950 = vlaneseq
      %v951 = vshrl.u32 %v950, 7
      %v952 = vsub.s32 %v949, %v951
      %v953 = vrot.slane %v931, %v952
      %v955 = vunpack.c.l.s4 1966171168
      %v956 = vunpack.c.0.s8 %v955
      %v957 = vlaneseq
      %v958 = vshrl.u32 %v957, 7
      %v959 = vsub.s32 %v956, %v958
      %v960 = vrot.slane %v932, %v959
      %v961 = vcombine.high %v939, %v939
      %v962 = vcombine.high %v946, %v946
      %v963 = vcombine.high %v953, %v953
      %v964 = vcombine.high %v960, %v960
      %vm973 = vcmask 253952
      %974 = vst.msk [vmem:[#allocation7] sm:$0x1] %vm973, %v939
      %975 = vst.msk [vmem:[#allocation7 + $0x1] sm:$0x1] %vm973, %v953
      %976 = vst.msk [vmem:[#allocation7 + $0x2] sm:$0x1] %vm973, %v961
      %977 = vst.msk [vmem:[#allocation7 + $0x3] sm:$0x1] %vm973, %v963
      %978 = vst.msk [vmem:[#allocation7 + $0x4] sm:$0x1] %vm973, %v946
      %979 = vst.msk [vmem:[#allocation7 + $0x5] sm:$0x1] %vm973, %v960
      %980 = vst.msk [vmem:[#allocation7 + $0x6] sm:$0x1] %vm973, %v962
      %981 = vst.msk [vmem:[#allocation7 + $0x7] sm:$0x1] %vm973, %v964
    $region25: #{tpu_custom_call.1} parent=1 // pred_fallthru
      _
    // Predicated region
    $region26: #{tpu_custom_call.1} parent=1 // pred_check
      _
    $region27: #{tpu_custom_call.1} parent=1 // pred_check_branch
      %983 = sbr.rel (0) target = $region29
    $region28: #{tpu_custom_call.1} parent=1 // pred_region
      %s985 = ssub.s32 128, 128
      %986 = vsyncadd [#allocation6], %s985
      %s987 = sshll.u32 [#allocation7], 4
      %s988 = int_to_ptr.vmem [resolvable:$true] %s987
      %993 = dma.vmem_to_hbm [thread:$0]  %s988, 128, %s3, [#allocation6], 16, 16, 1
    $region29: #{tpu_custom_call.1} parent=1 // pred_fallthru
      _
    // Predicated region
    $region30: #{tpu_custom_call.1} parent=1 // pred_check
      _
    $region31: #{tpu_custom_call.1} parent=1 // pred_check_branch
      %995 = sbr.rel (0) target = $region33
    $region32: #{tpu_custom_call.1} parent=1 // pred_region
      %996 = dma.done [#allocation6], 128
    $region33: #{tpu_custom_call.1} parent=1 // pred_fallthru
      _
    %997 = vsyncpa [#allocation5], 1
    %998 = vsyncpa [#allocation6], 1

</llo_original>
